<compile_context>
chip_gen: v6e
topology: v6e:2x2x1
jax: 0.10.0
libtpu: 0.0.40
codegen_flags: <defaults>
</compile_context>

<pallas_src>
import functools

import jax
import jax.numpy as jnp
import numpy as np
from jax.experimental import pallas as pl
from jax.experimental.pallas import tpu as pltpu


def _round_up(x, m):
    return ((x + m - 1) // m) * m


# ---- VMEM budget, queried once at import (conservative fallback = v7x 64 MiB) --
def _vmem_budget():
    try:
        cap = int(pltpu.get_tpu_info().vmem_capacity_bytes)
    except Exception:
        cap = 64 << 20
    limit = min(int(0.75 * cap), 100 << 20)   # scoped limit we request
    return limit, int(0.75 * limit)           # (vmem_limit_bytes, tile budget)


_VMEM_LIMIT_BYTES, _TILE_BUDGET_BYTES = _vmem_budget()


# ----------------------------- Pallas kernels -------------------------------- #
def _spmm_fullk_kernel(x_ref, at_ref, o_ref):
    # Whole reduction dim in one step: no accumulator VMEM round-trip.
    o_ref[...] = jnp.dot(
        x_ref[...], at_ref[...], preferred_element_type=jnp.float32
    ).astype(o_ref.dtype)


def _spmm_acc_kernel(x_ref, at_ref, o_ref, acc_ref):
    # K-tiled fallback: f32 accumulator resident across the K grid axis.
    k = pl.program_id(2)
    partial = jnp.dot(x_ref[...], at_ref[...], preferred_element_type=jnp.float32)

    @pl.when(k == 0)
    def _():
        acc_ref[...] = partial          # direct write, no zeros + add

    @pl.when(k > 0)
    def _():
        acc_ref[...] += partial

    @pl.when(k == pl.num_programs(2) - 1)
    def _():
        o_ref[...] = acc_ref[...].astype(o_ref.dtype)


# ----------------------------- tile selection -------------------------------- #
def _select_tiles(m, kp, n_pad, budget):
    # Row tile: minimize round_up(m, tm) - m; bf16 sublane packing -> mult of 16.
    if m <= 512:
        tm = _round_up(max(m, 1), 16)
        mp = tm
    else:
        tm, mp = 512, _round_up(m, 512)
        for cand in (384, 256, 128):
            mp_c = _round_up(m, cand)
            if mp_c < mp:
                tm, mp = cand, mp_c

    def footprint(tn, tk, full_k):
        buf = 4 * (tm * tk + tk * tn + tm * tn)   # bf16, double-buffered
        if not full_k:
            buf += 4 * tm * tn                    # f32 accumulator scratch
        return buf

    tn_cands = [t for t in (1024, 512, 256, 128) if n_pad % t == 0]
    tk_cands = [kp] + [
        t for t in (4096, 2048, 1024, 512, 256) if t < kp and kp % t == 0
    ]

    for tk in tk_cands:                 # prefer collapsing K (fewest grid steps)
        full_k = tk == kp
        for tn in tn_cands:             # then the widest N tile that fits
            if footprint(tn, tk, full_k) <= budget:
                # v7x megacore: guarantee >= 2 parallel (i, j) blocks.
                if (mp // tm) * (n_pad // tn) < 2 and tn > 128:
                    tn //= 2
                return tm, mp, tn, tk, full_k

    # Fallback for extremely tight budgets: smallest clean tiles.
    tk = 256 if kp % 256 == 0 else kp
    return tm, mp, 128, tk, tk == kp


# ------------------------------- forward ------------------------------------- #
@functools.partial(jax.jit, static_argnames=("out_features",))
def sparse_linear_forward(x, a_t_pad, *, out_features):
    """y = x @ A.T computed in a Pallas kernel.

    x:        (..., in_features)  bf16
    a_t_pad:  (K_pad, N_pad)      bf16 — densified A^T, zero-padded to
              256-multiples at parameter setup time.
    returns:  (..., out_features) bf16
    """
    in_features = x.shape[-1]
    lead = x.shape[:-1]
    m = int(np.prod(lead)) if lead else 1
    kp, n_pad = a_t_pad.shape

    if m == 0:  # static under jit
        return jnp.zeros((*lead, out_features), dtype=x.dtype)

    tm, mp, tn, tk, full_k = _select_tiles(m, kp, n_pad, _TILE_BUDGET_BYTES)

    # Zero-padded K contributes nothing to the dot.
    x_flat = x.reshape(m, in_features)
    if mp == m and kp == in_features:
        x_pad = x_flat                                   # no extra HBM copy
    else:
        x_pad = jnp.pad(x_flat, ((0, mp - m), (0, kp - in_features)))

    n_i, n_j = mp // tm, n_pad // tn

    if full_k:
        grid = (n_i, n_j)
        in_specs = [
            pl.BlockSpec((tm, kp), lambda i, j: (i, 0)),   # x resident across j
            pl.BlockSpec((kp, tn), lambda i, j: (0, j)),   # A^T streamed over j
        ]
        out_specs = pl.BlockSpec((tm, tn), lambda i, j: (i, j))
        scratch = []
        dims = ("parallel", "parallel")
        kernel = _spmm_fullk_kernel
        x_reads, at_reads = 1, n_i
    else:
        n_k = kp // tk
        grid = (n_i, n_j, n_k)
        in_specs = [
            pl.BlockSpec((tm, tk), lambda i, j, k: (i, k)),
            pl.BlockSpec((tk, tn), lambda i, j, k: (k, j)),
        ]
        out_specs = pl.BlockSpec((tm, tn), lambda i, j, k: (i, j))
        scratch = [pltpu.VMEM((tm, tn), jnp.float32)]
        dims = ("parallel", "parallel", "arbitrary")
        kernel = _spmm_acc_kernel
        x_reads, at_reads = n_j, n_i

    cost = pl.CostEstimate(
        flops=2 * mp * kp * n_pad,
        transcendentals=0,
        bytes_accessed=2 * (mp * kp * x_reads + kp * n_pad * at_reads + mp * n_pad),
    )

    out = pl.pallas_call(
        kernel,
        out_shape=jax.ShapeDtypeStruct((mp, n_pad), x.dtype),
        grid_spec=pltpu.PrefetchScalarGridSpec(
            num_scalar_prefetch=0,
            grid=grid,
            in_specs=in_specs,
            out_specs=out_specs,
            scratch_shapes=scratch,
        ),
        compiler_params=pltpu.CompilerParams(
            dimension_semantics=dims,
            vmem_limit_bytes=_VMEM_LIMIT_BYTES,
        ),
        cost_estimate=cost,
    )(x_pad, a_t_pad)

    return out[:m, :out_features].reshape(*lead, out_features)


# --------------------- deterministic parameter construction ----------------- #
def build_sparse_linear_params(key, density, shape, dtype=jnp.bfloat16):
    """Mimics SparseLinear.__init__ + set_mask: builds CSR buffers and values,
    densifies (equivalent to .to_dense()), and pre-computes the 256-padded A^T
    used by the forward kernel (transpose + padding hoisted out of the hot path)."""
    out_features, in_features = shape
    nnz = int(density * out_features * in_features)

    k_mask, k_vals = jax.random.split(key)

    # Deterministic mask with exactly `nnz` nonzeros (top-nnz of random scores).
    scores = np.asarray(jax.random.uniform(k_mask, (out_features * in_features,)))
    flat_idx = np.sort(np.argpartition(-scores, nnz - 1)[:nnz])
    rows = (flat_idx // in_features).astype(np.int32)
    cols = (flat_idx % in_features).astype(np.int32)

    # CSR buffers (same layout as the PyTorch module's registered buffers).
    row_offs = np.zeros((out_features + 1,), dtype=np.int32)
    np.add.at(row_offs[1:], rows, 1)
    row_offs = np.cumsum(row_offs).astype(np.int32)
    col_idx = cols.astype(np.int16)
    row_idx = np.argsort(-np.diff(row_offs)).astype(np.int16)  # unused in forward

    # values parameter (bf16), deterministic.
    values = jax.random.normal(k_vals, (nnz,), dtype=jnp.float32).astype(dtype)

    # Densify: equivalent to torch.sparse_csr_tensor(...).to_dense()
    a_dense = jnp.zeros((out_features, in_features), dtype=dtype)
    a_dense = a_dense.at[jnp.asarray(rows), jnp.asarray(cols)].set(values)

    # Pre-transposed, zero-padded A^T: (K_pad, N_pad), 256-multiples so every
    # MXU pass is full width on v6e/v7x.  Done once here (mask changes rarely).
    k_pad = _round_up(in_features, 256)
    n_pad = _round_up(out_features, 256)
    a_t_pad = jnp.zeros((k_pad, n_pad), dtype=dtype)
    a_t_pad = a_t_pad.at[:in_features, :out_features].set(a_dense.T)

    csr = dict(
        values=values,
        row_offs=jnp.asarray(row_offs),
        row_idx=jnp.asarray(row_idx),
        col_idx=jnp.asarray(col_idx),
    )
    return a_dense, a_t_pad, csr


# ---------------------------------- main ------------------------------------ #
if __name__ == "__main__":
    key = jax.random.PRNGKey(0)
    k_param, k_x = jax.random.split(key)

    density = 0.25
    out_features, in_features = 32, 64          # SparseLinear shape = (32, 64)
    batch, seq = 2, 8                            # x: (2, 8, 64) -> y: (2, 8, 32)

    a_dense, a_t_pad, csr = build_sparse_linear_params(
        k_param, density, (out_features, in_features), dtype=jnp.bfloat16
    )

    x = jax.random.normal(k_x, (batch, seq, in_features), dtype=jnp.float32).astype(
        jnp.bfloat16
    )

    y = sparse_linear_forward(x, a_t_pad, out_features=out_features)
    y = jax.block_until_ready(y)

    # Reference check (dense equivalent of the CSR SpMM).
    y_ref = jnp.einsum(
        "bsk,nk->bsn",
        x.astype(jnp.float32),
        a_dense.astype(jnp.float32),
    ).astype(jnp.bfloat16)
    np.testing.assert_allclose(
        np.asarray(y, dtype=np.float32),
        np.asarray(y_ref, dtype=np.float32),
        rtol=2e-2,
        atol=2e-2,
    )

    assert y.shape == (batch, seq, out_features)
    assert y.dtype == jnp.bfloat16
    print("KERNEL_OK")
</pallas_src>

<mosaic_0001>
module attributes {stable_mosaic.version = 11 : i64} {
  func.func @_spmm_fullk_kernel(%arg0: i32, %arg1: i32, %arg2: memref<16x256xbf16, #tpu.memory_space<vmem>>, %arg3: memref<256x128xbf16, #tpu.memory_space<vmem>>, %arg4: memref<16x128xbf16, #tpu.memory_space<vmem>>) attributes {dimension_semantics = [#tpu.dimension_semantics<parallel>, #tpu.dimension_semantics<parallel>], iteration_bounds = array<i64: 1, 2>, scalar_prefetch = 0 : i64, scratch_operands = 0 : i64, tpu.core_type = #tpu.core_type<tc>, window_params = [{transform_indices = @transform_0, window_bounds = array<i64: 16, 256>}, {transform_indices = @transform_1, window_bounds = array<i64: 256, 128>}, {transform_indices = @transform_2, window_bounds = array<i64: 16, 128>}]} {
    %c0 = arith.constant 0 : index
    %c0_0 = arith.constant 0 : index
    %0 = vector.load %arg2[%c0, %c0_0] : memref<16x256xbf16, #tpu.memory_space<vmem>>, vector<16x256xbf16>
    %c0_1 = arith.constant 0 : index
    %c0_2 = arith.constant 0 : index
    %1 = vector.load %arg3[%c0_1, %c0_2] : memref<256x128xbf16, #tpu.memory_space<vmem>>, vector<256x128xbf16>
    %cst = arith.constant dense<0.000000e+00> : vector<16x128xf32>
    %2 = tpu.matmul %0, %1, %cst {dimension_numbers = #tpu.dot_dimension_numbers<[1], [0], [0], [1], [0, 0, 1, 1], [], []>} : vector<16x256xbf16>, vector<256x128xbf16>, vector<16x128xf32> -> vector<16x128xf32>
    %3 = arith.truncf %2 : vector<16x128xf32> to vector<16x128xbf16>
    %c0_3 = arith.constant 0 : index
    %c0_4 = arith.constant 0 : index
    %4 = vector.load %arg4[%c0_3, %c0_4] : memref<16x128xbf16, #tpu.memory_space<vmem>>, vector<16x128xbf16>
    tpu.vector_store %arg4[%c0_3, %c0_4], %3 {strides = array<i32>} : memref<16x128xbf16, #tpu.memory_space<vmem>>, vector<16x128xbf16>,
    return
  }
  func.func @transform_0(%arg0: i32, %arg1: i32) -> (i32, i32) {
    %c0_i32 = arith.constant 0 : i32
    %c0_i32_0 = arith.constant 0 : i32
    return %arg0, %c0_i32 : i32, i32
  }
  func.func @transform_1(%arg0: i32, %arg1: i32) -> (i32, i32) {
    %c0_i32 = arith.constant 0 : i32
    %c0_i32_0 = arith.constant 0 : i32
    return %c0_i32, %arg1 : i32, i32
  }
  func.func @transform_2(%arg0: i32, %arg1: i32) -> (i32, i32) {
    %c0_i32 = arith.constant 0 : i32
    return %arg0, %arg1 : i32, i32
  }
}

</mosaic_0001>

<llo_original>
// kernel: sparse_linear_forward.1
$region0: #{sparse_linear_forward.1}
  #allocation0 [shape = 'u32[]', space=smem, size = 0x4, offset = 0x4, fixed_abs, tag = 'smem constant byte address 0x4 - core index']
  #allocation1 [shape = 'u32[144,128]{1,0:T(1,128)}', space=vmem, size = 0x12000, scoped, tag = 'internal scratch']
  %s0 = inlined_call_operand.vmem [shape: bf16[16,256], index: 0, kind: input, shape index: {}]
  %s1 = inlined_call_operand.hbm [shape: bf16[256,256], index: 1, kind: input, shape index: {}]
  %s2 = inlined_call_operand.vmem [shape: bf16[16,256], index: 2, kind: output, shape index: {}]
  %s3 = sld [smem:[#allocation0]]
  $region82: #{sparse_linear_forward.1} parent=0
    _
  %s5 = ssub.s32 1, %s3
  %s6 = scalar_select 0, %s5, %s3
  $region1: #{sparse_linear_forward.1} parent=0
    #allocation2 [shape = 'u8[131072]{0}', space=vmem, size = 0x20000, scoped, tag = 'input window, operand 1']
    #allocation3 [shape = 's32[2]{0}', space=sflag, size = 0x8, scoped, tag = 'scoped memory for sparse_linear_forward.1']
    #allocation4 [shape = 'u8[8192]{0}', space=vmem, size = 0x2000, scoped, tag = 'output window, operand 0']
    %7 = vsyncpa [#allocation3], 0
    %s8 = scalar_lea.sflag [#allocation3], 1
    %9 = vsyncpa %s8, 0
    loop: start=0, step=1, limit=4
    $region2: #{sparse_linear_forward.1} parent=1 // loop_pre_header
      _
    $region3: #{sparse_linear_forward.1} parent=1 // loop_header
      %s11 = sphi 0, %s15
      %p12 = scmp.ge.s32.totalorder %s11, 4
      %s18 = sphi 0, %s30
      %s19 = sphi 0, %s26
      %s20 = sphi 0, %s18
      %s21 = sphi 0, %s19
      %s22 = sphi 0, %s20
      %s23 = sphi 0, %s21
      %s33 = sphi 0, %s35
      %s36 = sphi 0, %s33
      %s37 = sphi 0, %s36
      %s53 = sphi 0, %s37
      %s59 = sphi 0, %s61
      %s62 = sphi 0, %s59
      %s63 = sphi 0, %s62
      %s79 = sphi 0, %s63
      %s87 = sphi 0, %s89
      %s90 = sphi 0, %s87
      %s91 = sphi 0, %s90
      %s107 = sphi 0, %s91
    $region4: #{sparse_linear_forward.1} parent=1 // loop_header_branch
      %14 = sbr.rel (%p12) target = $region8
    $region5: #{sparse_linear_forward.1} parent=1 // loop_body
      %s16 = ssub.s32 %s11, 1
      %s17 = ssub.s32 %s11, 2
      %s24 = sadd.s32 1, %s19
      %p25 = scmp.ge.s32.totalorder %s24, 2
      %s26 = scalar_select %p25, 0, %s24
      %s27 = sadd.s32 1, %s18
      %s28 = scalar_select %p25, %s27, %s18
      %p29 = scmp.ge.s32.totalorder %s28, 1
      %s30 = scalar_select %p29, 0, %s28
      %s31 = ssub.s32 %s18, %s30
      %p32 = scmp.eq.s32.totalorder %s31, 0
      %s34 = sadd.s32 %s33, 1
      %s35 = scalar_select %p32, %s33, %s34
      %p38 = pneg %p32
      %p39 = scmp.eq.s32.totalorder %s11, 1
      %p40 = por %p38, %p39
      %p41 = scmp.ne.s32.totalorder %s33, %s36
      %p42 = scmp.eq.s32.totalorder %s11, 0
      %p43 = por %p41, %p42
      %p44 = scmp.ne.s32.totalorder %s33, %s36
      %p45 = scmp.eq.s32.totalorder %s16, 1
      %p46 = por %p44, %p45
      %p47 = scmp.ne.s32.totalorder %s36, %s37
      %p48 = scmp.eq.s32.totalorder %s16, 0
      %p49 = por %p47, %p48
      %p50 = scmp.ne.s32.totalorder %s36, %s37
      %p51 = scmp.eq.s32.totalorder %s17, 1
      %p52 = por %p50, %p51
      %p54 = scmp.ne.s32.totalorder %s37, %s53
      %p55 = scmp.eq.s32.totalorder %s17, 0
      %p56 = por %p54, %p55
      %s57 = ssub.s32 %s19, %s26
      %p58 = scmp.eq.s32.totalorder %s57, 0
      %s60 = sadd.s32 %s59, 1
      %s61 = scalar_select %p58, %s59, %s60
      %p64 = pneg %p58
      %p65 = scmp.eq.s32.totalorder %s11, 1
      %p66 = por %p64, %p65
      %p67 = scmp.ne.s32.totalorder %s59, %s62
      %p68 = scmp.eq.s32.totalorder %s11, 0
      %p69 = por %p67, %p68
      %p70 = scmp.ne.s32.totalorder %s59, %s62
      %p71 = scmp.eq.s32.totalorder %s16, 1
      %p72 = por %p70, %p71
      %p73 = scmp.ne.s32.totalorder %s62, %s63
      %p74 = scmp.eq.s32.totalorder %s16, 0
      %p75 = por %p73, %p74
      %p76 = scmp.ne.s32.totalorder %s62, %s63
      %p77 = scmp.eq.s32.totalorder %s17, 1
      %p78 = por %p76, %p77
      %p80 = scmp.ne.s32.totalorder %s63, %s79
      %p81 = scmp.eq.s32.totalorder %s17, 0
      %p82 = por %p80, %p81
      %s83 = ssub.s32 %s18, %s30
      %s84 = ssub.s32 %s19, %s26
      %s85 = sor.u32 %s83, %s84
      %p86 = scmp.eq.s32.totalorder %s85, 0
      %s88 = sadd.s32 %s87, 1
      %s89 = scalar_select %p86, %s87, %s88
      %p92 = pneg %p86
      %p93 = scmp.eq.s32.totalorder %s11, 1
      %p94 = por %p92, %p93
      %p95 = scmp.ne.s32.totalorder %s87, %s90
      %p96 = scmp.eq.s32.totalorder %s11, 0
      %p97 = por %p95, %p96
      %p98 = scmp.ne.s32.totalorder %s87, %s90
      %p99 = scmp.eq.s32.totalorder %s16, 1
      %p100 = por %p98, %p99
      %p101 = scmp.ne.s32.totalorder %s90, %s91
      %p102 = scmp.eq.s32.totalorder %s16, 0
      %p103 = por %p101, %p102
      %p104 = scmp.ne.s32.totalorder %s90, %s91
      %p105 = scmp.eq.s32.totalorder %s17, 1
      %p106 = por %p104, %p105
      %p108 = scmp.ne.s32.totalorder %s91, %s107
      %p109 = scmp.eq.s32.totalorder %s17, 0
      %p110 = por %p108, %p109
      %p111 = scmp.le.s32.totalorder 1, %s11
      %p112 = scmp.lt.s32.totalorder %s11, 3
      %p113 = pnand %p111, %p112
      %p114 = pneg %p113
      // Predicated region
      $region9: #{sparse_linear_forward.1} parent=5 // pred_check
        _
      $region10: #{sparse_linear_forward.1} parent=5 // pred_check_branch
        %116 = sbr.rel (%p113) target = $region12
      $region11: #{sparse_linear_forward.1} parent=5 // pred_region
        %s117 = ssub.s32 %s11, 1
        // Predicated region
        $region13: #{sparse_linear_forward.1} parent=11 // pred_check
          %p118 = pneg %p49
        $region14: #{sparse_linear_forward.1} parent=11 // pred_check_branch
          %120 = sbr.rel (%p118) target = $region16
        $region15: #{sparse_linear_forward.1} parent=11 // pred_region
          %s121 = smul.u32 2, %s20
          %p122 = scmp.lt.s32.totalorder %s121, 1
          %s123 = scalar_select %p122, %s121, 1
          %s124 = smul.addr %s123, 2
          %s125 = smul.addr %s124, 4
          %s126 = scalar_lea.vmem %s0, %s125
          %s127 = smul.u32 2, %s20
        $region16: #{sparse_linear_forward.1} parent=11 // pred_fallthru
          _
      $region12: #{sparse_linear_forward.1} parent=5 // pred_fallthru
        _
      %p128 = scmp.lt.s32.totalorder %s11, 2
      // Predicated region
      $region17: #{sparse_linear_forward.1} parent=5 // pred_check
        %p129 = pneg %p128
      $region18: #{sparse_linear_forward.1} parent=5 // pred_check_branch
        %131 = sbr.rel (%p129) target = $region20
      $region19: #{sparse_linear_forward.1} parent=5 // pred_region
        // Predicated region
        $region21: #{sparse_linear_forward.1} parent=19 // pred_check
          %p132 = pneg %p69
        $region22: #{sparse_linear_forward.1} parent=19 // pred_check_branch
          %134 = sbr.rel (%p132) target = $region24
        $region23: #{sparse_linear_forward.1} parent=19 // pred_region
          %s135 = sand.u32 %s59, 1
          %s136 = scalar_lea.sflag [#allocation3], %s135
          %s137 = sand.u32 %s59, 1
          %s138 = smul.addr %s137, 128
          %s139 = scalar_lea.vmem [#allocation2], %s138
          %s141 = ssub.s32 2048, 2048
          %142 = vsyncadd %s136, %s141
          %s143 = smul.addr %s19, 64
          %s144 = scalar_lea.hbm %s1, %s143
          %s145 = sshll.u32 %s139, 4
          %s146 = int_to_ptr.vmem [resolvable:$true] %s145
          %151 = dma.hbm_to_vmem [thread:$0]  %s144, 2048, %s146, %s136, 128, 64, 4
        $region24: #{sparse_linear_forward.1} parent=19 // pred_fallthru
          _
      $region20: #{sparse_linear_forward.1} parent=5 // pred_fallthru
        _
      %p152 = scmp.le.s32.totalorder 1, %s11
      %p153 = scmp.lt.s32.totalorder %s11, 3
      %p154 = pnand %p152, %p153
      %p155 = pneg %p154
      // Predicated region
      $region25: #{sparse_linear_forward.1} parent=5 // pred_check
        _
      $region26: #{sparse_linear_forward.1} parent=5 // pred_check_branch
        %157 = sbr.rel (%p154) target = $region28
      $region27: #{sparse_linear_forward.1} parent=5 // pred_region
        %s158 = ssub.s32 %s11, 1
        %s159 = sand.u32 %s62, 1
        %s160 = scalar_lea.sflag [#allocation3], %s159
        %s161 = sand.u32 %s62, 1
        %s162 = smul.addr %s161, 128
        %s163 = scalar_lea.vmem [#allocation2], %s162
        // Predicated region
        $region29: #{sparse_linear_forward.1} parent=27 // pred_check
          %p164 = pneg %p75
        $region30: #{sparse_linear_forward.1} parent=27 // pred_check_branch
          %166 = sbr.rel (%p164) target = $region32
        $region31: #{sparse_linear_forward.1} parent=27 // pred_region
          %167 = dma.done %s160, 2048
        $region32: #{sparse_linear_forward.1} parent=27 // pred_fallthru
          _
        %s168 = smul.u32 2, %s20
        %p169 = scmp.lt.s32.totalorder %s168, 1
        %s170 = scalar_select %p169, %s168, 1
        %s171 = smul.addr %s170, 2
        %s172 = smul.addr %s171, 4
        %s173 = scalar_lea.vmem %s0, %s172
        %p174 = pneg %p49
        %p175 = pneg %p46
        %s176 = sand.u32 %s62, 1
        %s177 = scalar_lea.sflag [#allocation3], %s176
        %s178 = sand.u32 %s62, 1
        %s179 = smul.addr %s178, 128
        %s180 = scalar_lea.vmem [#allocation2], %s179
        %p181 = pneg %p75
        %p182 = pneg %p72
        %p183 = pneg %p103
        %p184 = pneg %p100
        %s185 = sand.u32 %s90, 1
        %s186 = sand.u32 %s90, 1
        %s187 = smul.addr %s186, 8
        %s188 = scalar_lea.vmem [#allocation4], %s187
        %s189 = smul.u32 2, %s20
        %p190 = scmp.lt.s32.totalorder %s189, 1
        %s191 = scalar_select %p190, %s189, 1
        %s192 = smul.addr %s191, 2
        %s193 = smul.addr %s192, 4
        %s194 = scalar_lea.vmem %s0, %s193
        %s195 = smul.u32 2, %s20
        %s196 = smul.u32 2, %s20
        %v198 = vld [vmem:[%s194] sm:$0xff]
        %v199 = vld [vmem:[%s194 + $0x8] sm:$0xff]
        %v200 = vld [vmem:[%s163] sm:$0xf]
        %v201 = vld [vmem:[%s163 + $0x4] sm:$0xf]
        %v202 = vld [vmem:[%s163 + $0x8] sm:$0xf]
        %v203 = vld [vmem:[%s163 + $0xc] sm:$0xf]
        %v204 = vld [vmem:[%s163 + $0x10] sm:$0xf]
        %v205 = vld [vmem:[%s163 + $0x14] sm:$0xf]
        %v206 = vld [vmem:[%s163 + $0x18] sm:$0xf]
        %v207 = vld [vmem:[%s163 + $0x1c] sm:$0xf]
        %v208 = vld [vmem:[%s163 + $0x20] sm:$0xf]
        %v209 = vld [vmem:[%s163 + $0x24] sm:$0xf]
        %v210 = vld [vmem:[%s163 + $0x28] sm:$0xf]
        %v211 = vld [vmem:[%s163 + $0x2c] sm:$0xf]
        %v212 = vld [vmem:[%s163 + $0x30] sm:$0xf]
        %v213 = vld [vmem:[%s163 + $0x34] sm:$0xf]
        %v214 = vld [vmem:[%s163 + $0x38] sm:$0xf]
        %v215 = vld [vmem:[%s163 + $0x3c] sm:$0xf]
        %v216 = vld [vmem:[%s163 + $0x40] sm:$0xf]
        %v217 = vld [vmem:[%s163 + $0x44] sm:$0xf]
        %v218 = vld [vmem:[%s163 + $0x48] sm:$0xf]
        %v219 = vld [vmem:[%s163 + $0x4c] sm:$0xf]
        %v220 = vld [vmem:[%s163 + $0x50] sm:$0xf]
        %v221 = vld [vmem:[%s163 + $0x54] sm:$0xf]
        %v222 = vld [vmem:[%s163 + $0x58] sm:$0xf]
        %v223 = vld [vmem:[%s163 + $0x5c] sm:$0xf]
        %v224 = vld [vmem:[%s163 + $0x60] sm:$0xf]
        %v225 = vld [vmem:[%s163 + $0x64] sm:$0xf]
        %v226 = vld [vmem:[%s163 + $0x68] sm:$0xf]
        %v227 = vld [vmem:[%s163 + $0x6c] sm:$0xf]
        %v228 = vld [vmem:[%s163 + $0x70] sm:$0xf]
        %v229 = vld [vmem:[%s163 + $0x74] sm:$0xf]
        %v230 = vld [vmem:[%s163 + $0x78] sm:$0xf]
        %v231 = vld [vmem:[%s163 + $0x7c] sm:$0xf]
        %v234 = vunpack.c.l.b16 %v198
        %v235 = vunpack.c.h.b16 %v198
        %v236 = vunpack.c.l.b16 %v199
        %v237 = vunpack.c.h.b16 %v199
        %v238 = vpack.c.b16 %v236, %v234
        %v239 = vpack.c.b16 %v237, %v235
        %v274 = vunpack.c.l.b16 %v200
        %v275 = vunpack.c.l.b16 %v201
        %v276 = vunpack.c.l.b16 %v202
        %v277 = vunpack.c.l.b16 %v203
        %v278 = vunpack.c.l.b16 %v204
        %v279 = vunpack.c.l.b16 %v205
        %v280 = vunpack.c.l.b16 %v206
        %v281 = vunpack.c.l.b16 %v207
        %v282 = vunpack.c.l.b16 %v208
        %v283 = vunpack.c.l.b16 %v209
        %v284 = vunpack.c.l.b16 %v210
        %v285 = vunpack.c.l.b16 %v211
        %v286 = vunpack.c.l.b16 %v212
        %v287 = vunpack.c.l.b16 %v213
        %v288 = vunpack.c.l.b16 %v214
        %v289 = vunpack.c.l.b16 %v215
        %v290 = vunpack.c.l.b16 %v216
        %v291 = vunpack.c.l.b16 %v217
        %v292 = vunpack.c.l.b16 %v218
        %v293 = vunpack.c.l.b16 %v219
        %v294 = vunpack.c.l.b16 %v220
        %v295 = vunpack.c.l.b16 %v221
        %v296 = vunpack.c.l.b16 %v222
        %v297 = vunpack.c.l.b16 %v223
        %v298 = vunpack.c.l.b16 %v224
        %v299 = vunpack.c.l.b16 %v225
        %v300 = vunpack.c.l.b16 %v226
        %v301 = vunpack.c.l.b16 %v227
        %v302 = vunpack.c.l.b16 %v228
        %v303 = vunpack.c.l.b16 %v229
        %v304 = vunpack.c.l.b16 %v230
        %v305 = vunpack.c.l.b16 %v231
        %v306 = vpack.c.b16 %v275, %v274
        %v307 = vpack.c.b16 %v277, %v276
        %v308 = vpack.c.b16 %v279, %v278
        %v309 = vpack.c.b16 %v281, %v280
        %v310 = vpack.c.b16 %v283, %v282
        %v311 = vpack.c.b16 %v285, %v284
        %v312 = vpack.c.b16 %v287, %v286
        %v313 = vpack.c.b16 %v289, %v288
        %v314 = vpack.c.b16 %v291, %v290
        %v315 = vpack.c.b16 %v293, %v292
        %v316 = vpack.c.b16 %v295, %v294
        %v317 = vpack.c.b16 %v297, %v296
        %v318 = vpack.c.b16 %v299, %v298
        %v319 = vpack.c.b16 %v301, %v300
        %v320 = vpack.c.b16 %v303, %v302
        %v321 = vpack.c.b16 %v305, %v304
        %338 = vmatprep.subr.bf16.mxu0 0
        %339 = vmatpush1.bf16.msra.mxu0 %v313
        %340 = vmatprep.subr.bf16.mxu0 0
        %341 = vmatpush1.bf16.msra.mxu0 %v312
        %342 = vmatprep.subr.bf16.mxu0 0
        %343 = vmatpush1.bf16.msra.mxu0 %v311
        %344 = vmatprep.subr.bf16.mxu0 0
        %345 = vmatpush1.bf16.msra.mxu0 %v310
        %346 = vmatprep.subr.bf16.mxu0 0
        %347 = vmatpush1.bf16.msra.mxu0 %v309
        %348 = vmatprep.subr.bf16.mxu0 0
        %349 = vmatpush1.bf16.msra.mxu0 %v308
        %350 = vmatprep.subr.bf16.mxu0 0
        %351 = vmatpush1.bf16.msra.mxu0 %v307
        %352 = vmatprep.subr.bf16.mxu0 0
        %353 = vmatpush1.bf16.msra.mxu0 %v306
        %354 = vmatprep.subr.bf16.mxu0 0
        %355 = vmatpush2.bf16.msra.mxu0 %v321
        %356 = vmatprep.subr.bf16.mxu0 0
        %357 = vmatpush2.bf16.msra.mxu0 %v320
        %358 = vmatprep.subr.bf16.mxu0 0
        %359 = vmatpush2.bf16.msra.mxu0 %v319
        %360 = vmatprep.subr.bf16.mxu0 0
        %361 = vmatpush2.bf16.msra.mxu0 %v318
        %362 = vmatprep.subr.bf16.mxu0 0
        %363 = vmatpush2.bf16.msra.mxu0 %v317
        %364 = vmatprep.subr.bf16.mxu0 0
        %365 = vmatpush2.bf16.msra.mxu0 %v316
        %366 = vmatprep.subr.bf16.mxu0 0
        %367 = vmatpush2.bf16.msra.mxu0 %v315
        %368 = vmatprep.subr.bf16.mxu0 0
        %369 = vmatpush2.bf16.msra.mxu0 %v314
        %370 = vmatprep.mubr.bf16.mxu0 %v239
        %371 = vmatmul.mubr.bf16.gmra.mxu0 %v238
        %v372 = vpop.f32.mrf.mxu0
        %v373 = vadd.f32 0.0, %v372
        %v374 = vpop.f32.mrf.mxu0
        %v375 = vpop.f32.mrf.mxu0
        %v376 = vadd.f32 0.0, %v375
        %v377 = vpop.f32.mrf.mxu0
        %378 = vdwg.mxu0
        %v379 = vpack.c.bf16 %v376, %v373
        %v381 = vunpack.c.l.b16 %v379
        %v382 = vunpack.c.h.b16 %v379
        %v383 = vpack.c.b16 %v381, %v381
        %v384 = vpack.c.b16 %v382, %v382
        %387 = vst [vmem:[%s188] sm:$0xf] %v383
        %388 = vst [vmem:[%s188 + $0x4] sm:$0xf] %v384
        %s389 = sand.u32 %s90, 1
        %s390 = sand.u32 %s90, 1
        %s391 = smul.addr %s390, 8
        %s392 = scalar_lea.vmem [#allocation4], %s391
        // Predicated region
        $region33: #{sparse_linear_forward.1} parent=27 // pred_check
          %p393 = pneg %p100
        $region34: #{sparse_linear_forward.1} parent=27 // pred_check_branch
          %395 = sbr.rel (%p393) target = $region36
        $region35: #{sparse_linear_forward.1} parent=27 // pred_region
          %s396 = smul.u32 2, %s20
          %s397 = smul.addr %s396, 2
          %s398 = sadd.s32 %s21, %s397
          %s399 = smul.addr %s398, 4
          %s400 = scalar_lea.vmem %s2, %s399
          // Predicated region
          $region37: #{sparse_linear_forward.1} parent=35 // pred_check
            _
          $region38: #{sparse_linear_forward.1} parent=35 // pred_check_branch
            %402 = sbr.rel (0) target = $region40
          $region39: #{sparse_linear_forward.1} parent=35 // pred_region
            // Predicated region
            $region41: #{sparse_linear_forward.1} parent=39 // pred_check
              _
            $region42: #{sparse_linear_forward.1} parent=39 // pred_check_branch
              %404 = sbr.rel target = $region44
            $region43: #{sparse_linear_forward.1} parent=39 // pred_region
              // Predicated region
              $region56: #{sparse_linear_forward.1} parent=43 // pred_check
                _
              $region57: #{sparse_linear_forward.1} parent=43 // pred_check_branch
                %422 = sbr.rel (0) target = $region59
              $region58: #{sparse_linear_forward.1} parent=43 // pred_region
                loop: start=0, step=1, limit=1
                $region60: #{sparse_linear_forward.1} parent=58 // loop_pre_header
                  _
                $region61: #{sparse_linear_forward.1} parent=58 // loop_header
                  %s424 = sphi 0, %s428
                  %p425 = scmp.ge.s32.totalorder %s424, 1
                  %s429 = sphi %s392, %s392
                  %s430 = sphi %s400, %s400
                $region62: #{sparse_linear_forward.1} parent=58 // loop_header_branch
                  %427 = sbr.rel (%p425) target = $region66
                $region63: #{sparse_linear_forward.1} parent=58 // loop_body
                  _
                $region64: #{sparse_linear_forward.1} parent=58 // loop_footer
                  %s428 = sadd.s32 1, %s424
                $region65: #{sparse_linear_forward.1} parent=58 // loop_footer_branch
                  %423 = sbr.rel target = $region61
                $region66: #{sparse_linear_forward.1} parent=58 // loop_exit
                  _
                %s432 = ssub.s32 16, 1
                loop: start=0, step=1, limit=1
                $region67: #{sparse_linear_forward.1} parent=58 // loop_pre_header
                  _
                $region68: #{sparse_linear_forward.1} parent=58 // loop_header
                  %s434 = sphi 0, %s438
                  %p435 = scmp.ge.s32.totalorder %s434, 1
                  %s439 = sphi %s392, %s392
                  %s440 = sphi %s400, %s400
                $region69: #{sparse_linear_forward.1} parent=58 // loop_header_branch
                  %437 = sbr.rel (%p435) target = $region73
                $region70: #{sparse_linear_forward.1} parent=58 // loop_body
                  %v441 = vld [vmem:[%s439] sm:%s432]
                  %442 = vst [vmem:[%s440] sm:%s432] %v441
                  %v443 = vld [vmem:[%s439 + $0x4] sm:%s432]
                  %444 = vst [vmem:[%s440 + $0x8] sm:%s432] %v443
                $region71: #{sparse_linear_forward.1} parent=58 // loop_footer
                  %s438 = sadd.s32 1, %s434
                $region72: #{sparse_linear_forward.1} parent=58 // loop_footer_branch
                  %433 = sbr.rel target = $region68
                $region73: #{sparse_linear_forward.1} parent=58 // loop_exit
                  _
              $region59: #{sparse_linear_forward.1} parent=43 // pred_fallthru
                _
            $region44: #{sparse_linear_forward.1} parent=39 // pred_fallthru
              _
            // Predicated region
            $region45: #{sparse_linear_forward.1} parent=39 // pred_check
              _
            $region46: #{sparse_linear_forward.1} parent=39 // pred_check_branch
              %406 = sbr.rel (0) target = $region48
            $region47: #{sparse_linear_forward.1} parent=39 // pred_region
              %s408 = ssub.s32 16, 1
              loop: start=0, step=1, limit=1
              $region49: #{sparse_linear_forward.1} parent=47 // loop_pre_header
                _
              $region50: #{sparse_linear_forward.1} parent=47 // loop_header
                %s410 = sphi 0, %s414
                %p411 = scmp.ge.s32.totalorder %s410, 1
                %s415 = sphi %s392, %s392
                %s416 = sphi %s400, %s400
              $region51: #{sparse_linear_forward.1} parent=47 // loop_header_branch
                %413 = sbr.rel (%p411) target = $region55
              $region52: #{sparse_linear_forward.1} parent=47 // loop_body
                %v417 = vld [vmem:[%s415] sm:%s408]
                %418 = vst [vmem:[%s416] sm:%s408] %v417
                %v419 = vld [vmem:[%s415 + $0x4] sm:%s408]
                %420 = vst [vmem:[%s416 + $0x8] sm:%s408] %v419
              $region53: #{sparse_linear_forward.1} parent=47 // loop_footer
                %s414 = sadd.s32 1, %s410
              $region54: #{sparse_linear_forward.1} parent=47 // loop_footer_branch
                %409 = sbr.rel target = $region50
              $region55: #{sparse_linear_forward.1} parent=47 // loop_exit
                _
            $region48: #{sparse_linear_forward.1} parent=39 // pred_fallthru
              _
          $region40: #{sparse_linear_forward.1} parent=35 // pred_fallthru
            _
          %445 = vnop
        $region36: #{sparse_linear_forward.1} parent=27 // pred_fallthru
          _
      $region28: #{sparse_linear_forward.1} parent=5 // pred_fallthru
        _
      %p446 = scmp.le.s32.totalorder 2, %s11
      // Predicated region
      $region74: #{sparse_linear_forward.1} parent=5 // pred_check
        %p447 = pneg %p446
      $region75: #{sparse_linear_forward.1} parent=5 // pred_check_branch
        %449 = sbr.rel (%p447) target = $region77
      $region76: #{sparse_linear_forward.1} parent=5 // pred_region
        %s450 = ssub.s32 %s11, 2
        // Predicated region
        $region78: #{sparse_linear_forward.1} parent=76 // pred_check
          %p451 = pneg %p106
        $region79: #{sparse_linear_forward.1} parent=76 // pred_check_branch
          %453 = sbr.rel (%p451) target = $region81
        $region80: #{sparse_linear_forward.1} parent=76 // pred_region
          %s454 = sand.u32 %s91, 1
          %s455 = sand.u32 %s91, 1
          %s456 = smul.addr %s455, 8
          %s457 = scalar_lea.vmem [#allocation4], %s456
        $region81: #{sparse_linear_forward.1} parent=76 // pred_fallthru
          _
      $region77: #{sparse_linear_forward.1} parent=5 // pred_fallthru
        _
    $region6: #{sparse_linear_forward.1} parent=1 // loop_footer
      %s15 = sadd.s32 1, %s11
    $region7: #{sparse_linear_forward.1} parent=1 // loop_footer_branch
      %10 = sbr.rel target = $region3
    $region8: #{sparse_linear_forward.1} parent=1 // loop_exit
      _
    %458 = vsyncpa [#allocation3], 1
    %s459 = scalar_lea.sflag [#allocation3], 1
    %460 = vsyncpa %s459, 1

</llo_original>
